<compile_context>
chip_gen: v5e
topology: v5e:2x2
jax: 0.10.0
libtpu: 0.0.40
codegen_flags: <defaults>
</compile_context>

<pallas_src>
import functools

import jax
import jax.numpy as jnp
from jax import lax
from jax.experimental import pallas as pl
from jax.experimental.pallas import tpu as pltpu


def _round_up(x, m):
    return ((x + m - 1) // m) * m


# ----------------------------------------------------------------------------- #
# Hardware-aware knobs
# ----------------------------------------------------------------------------- #
def _pick_vmem_limit():
    """Scoped-VMEM budget: ~96 MiB on 128 MiB parts (v5e/v6e), ~40 MiB on v7x."""
    try:
        cap = int(pltpu.get_tpu_info().vmem_capacity_bytes)
    except Exception:
        cap = 0
    if cap >= 128 * 1024 * 1024:
        return 96 * 1024 * 1024
    if cap > 0:
        return min(40 * 1024 * 1024, (cap * 3) // 4)
    return 32 * 1024 * 1024          # unknown part: conservative, safe everywhere


_BUFFERED_1 = None


def _buffered_1_supported():
    """Probe pipeline_mode=pl.Buffered(1) (single-buffer loop-invariant blocks)."""
    global _BUFFERED_1
    if _BUFFERED_1 is not None:
        return _BUFFERED_1

    def _k(x_ref, o_ref):
        o_ref[...] = x_ref[...] + 1.0

    try:
        spec = pl.BlockSpec((8, 128), lambda i: (0, 0),
                            pipeline_mode=pl.Buffered(1))
        f = pl.pallas_call(
            _k,
            out_shape=jax.ShapeDtypeStruct((8, 128), jnp.float32),
            grid_spec=pltpu.PrefetchScalarGridSpec(
                num_scalar_prefetch=0, grid=(2,),
                in_specs=[spec],
                out_specs=pl.BlockSpec((8, 128), lambda i: (0, 0))))
        jax.block_until_ready(f(jnp.zeros((8, 128), jnp.float32)))
        _BUFFERED_1 = True
    except Exception:
        _BUFFERED_1 = False
    return _BUFFERED_1


def _invariant_spec(block_shape, index_map):
    """BlockSpec for loop-invariant blocks: single-buffered when supported."""
    if _buffered_1_supported():
        return pl.BlockSpec(block_shape, index_map, pipeline_mode=pl.Buffered(1))
    return pl.BlockSpec(block_shape, index_map)


# ----------------------------------------------------------------------------- #
# Row/column-tiled matmul + bias:  out = x @ w + b
# Used for (a) the hoisted LSTM input projection x @ W_ih_fused + b and (b) the FC.
# ----------------------------------------------------------------------------- #
def _matmul_bias_kernel(x_ref, w_ref, b_ref, o_ref):
    o_ref[...] = (jnp.dot(x_ref[...], w_ref[...],
                          preferred_element_type=jnp.float32)
                  + b_ref[...]).astype(o_ref.dtype)


def _pick_row_tile(n, target):
    if n <= target:
        return n
    start = target - (target % 8)
    for rt in range(start, 7, -8):       # n is always a multiple of 8 here
        if n % rt == 0:
            return rt
    return n


def _pick_col_tile(k, m, budget_bytes):
    def fits(cm, nbuf):
        return k * cm * 2 * nbuf <= budget_bytes    # bf16 weight slab
    if fits(m, 2) or m % 128 != 0:
        return m
    cm = m - 128
    while cm >= 128:
        if m % cm == 0 and fits(cm, 2):
            return cm
        cm -= 128
    return 128


def matmul_bias(x, w, b, out_dtype, *, vmem_limit, row_tile=256):
    """x: (N, K) bf16; w: (K, M) bf16; b: (1, M) f32  ->  (N, M) out_dtype."""
    N, K = x.shape
    M = w.shape[1]
    rn = _pick_row_tile(N, row_tile)
    cm = _pick_col_tile(K, M, vmem_limit // 3)
    grid = (N // rn, M // cm)
    wb_spec = _invariant_spec if grid[1] == 1 else pl.BlockSpec

    grid_spec = pltpu.PrefetchScalarGridSpec(
        num_scalar_prefetch=0,
        grid=grid,
        in_specs=[
            pl.BlockSpec((rn, K), lambda i, j: (i, 0)),
            wb_spec((K, cm), lambda i, j: (0, j)),
            wb_spec((1, cm), lambda i, j: (0, j)),
        ],
        out_specs=pl.BlockSpec((rn, cm), lambda i, j: (i, j)),
    )
    return pl.pallas_call(
        _matmul_bias_kernel,
        out_shape=jax.ShapeDtypeStruct((N, M), out_dtype),
        grid_spec=grid_spec,
        compiler_params=pltpu.CompilerParams(
            dimension_semantics=("parallel", "parallel"),
            vmem_limit_bytes=vmem_limit),
    )(x, w, b)


# ----------------------------------------------------------------------------- #
# LSTM recurrence kernel.  Grid = (batch tiles ["parallel"], time tiles ["arbitrary"]).
# Gates were precomputed (x @ W_ih + b), gate column order i | f | o | g.
# ----------------------------------------------------------------------------- #
def _lstm_recurrence_kernel(gx_ref, whh_ref, h0_ref, c0_ref,
                            y_ref, hT_ref, cT_ref, h_s, c_s,
                            *, t_total, needs_mask, unroll):
    tt = gx_ref.shape[0]
    Hp = h_s.shape[-1]
    t_tile = pl.program_id(1)

    @pl.when(t_tile == 0)
    def _():
        h_s[...] = h0_ref[...].astype(jnp.float32)
        c_s[...] = c0_ref[...].astype(jnp.float32)

    whh = whh_ref[...]                          # hoisted loop-invariant weight read
    if needs_mask:
        valid_steps = t_total - t_tile * tt     # only last tile has a ragged tail

    def step(t, carry):
        h, c = carry
        g = gx_ref[t].astype(jnp.float32) + jnp.dot(
            h.astype(whh.dtype), whh, preferred_element_type=jnp.float32)
        sig = jax.nn.sigmoid(g[:, :3 * Hp])     # one grouped EUP slab for i|f|o
        i_g = sig[:, :Hp]
        f_g = sig[:, Hp:2 * Hp]
        o_g = sig[:, 2 * Hp:]
        g_g = jnp.tanh(g[:, 3 * Hp:])
        c_new = f_g * c + i_g * g_g
        h_new = o_g * jnp.tanh(c_new)
        y_ref[t] = h_new.astype(y_ref.dtype)
        if needs_mask:
            valid = t < valid_steps
            h_new = jnp.where(valid, h_new, h)
            c_new = jnp.where(valid, c_new, c)
        return h_new, c_new

    h_fin, c_fin = lax.fori_loop(0, tt, step, (h_s[...], c_s[...]),
                                 unroll=unroll)
    h_s[...] = h_fin
    c_s[...] = c_fin

    @pl.when(t_tile == pl.num_programs(1) - 1)
    def _():
        hT_ref[...] = h_fin.astype(hT_ref.dtype)
        cT_ref[...] = c_fin.astype(cT_ref.dtype)


def _pick_batch_tile(Bp):
    """Split the batch across v7x's two TensorCores when it spans >=2 sublane tiles."""
    if Bp >= 16 and (Bp // 2) % 8 == 0:
        return Bp // 2
    return Bp


def _pick_time_tile(T, bt, Hp, vmem_limit):
    per_step = bt * 5 * Hp * 2 * 2       # (4Hp gates + Hp y) bf16, double-buffered
    budget = max(1 << 20, vmem_limit // 4)
    cap = max(1, budget // per_step)
    if cap >= T:
        return T                         # whole gates slab fits: single invocation
    best = 1
    for d in range(1, min(cap, T) + 1):  # largest divisor of T under the cap
        if T % d == 0:
            best = d
    if best >= max(2, cap // 2):
        return best
    return cap                           # awkward T: pad + mask inside the kernel


def lstm_layer(x2d, T, Bp, wih, whh, b, h0, c0, *, vmem_limit, row_tile):
    """One LSTM layer.  x2d: (T*Bp, D_in_p) time-major flattened (bf16)."""
    Hp = whh.shape[0]
    G = 4 * Hp

    # Hoisted input projection: one big (T*Bp, D_in_p) @ (D_in_p, 4Hp) matmul.
    gates = matmul_bias(x2d, wih, b, out_dtype=wih.dtype,
                        vmem_limit=vmem_limit, row_tile=row_tile)
    gates3 = gates.reshape(T, Bp, G)                       # free: contiguous

    bt = _pick_batch_tile(Bp)
    tt = _pick_time_tile(T, bt, Hp, vmem_limit)
    n_tt = pl.cdiv(T, tt)
    Tp = n_tt * tt
    if Tp != T:
        gates3 = jnp.pad(gates3, ((0, Tp - T), (0, 0), (0, 0)))

    grid = (Bp // bt, n_tt)
    state_spec = _invariant_spec if grid[0] == 1 else pl.BlockSpec

    kernel = functools.partial(_lstm_recurrence_kernel,
                               t_total=T, needs_mask=(Tp != T),
                               unroll=max(1, min(8, tt)))

    grid_spec = pltpu.PrefetchScalarGridSpec(
        num_scalar_prefetch=0,
        grid=grid,
        in_specs=[
            pl.BlockSpec((tt, bt, G), lambda bi, ti: (ti, bi, 0)),
            _invariant_spec((Hp, G), lambda bi, ti: (0, 0)),
            state_spec((bt, Hp), lambda bi, ti: (bi, 0)),
            state_spec((bt, Hp), lambda bi, ti: (bi, 0)),
        ],
        out_specs=[
            pl.BlockSpec((tt, bt, Hp), lambda bi, ti: (ti, bi, 0)),
            pl.BlockSpec((bt, Hp), lambda bi, ti: (bi, 0)),
            pl.BlockSpec((bt, Hp), lambda bi, ti: (bi, 0)),
        ],
        scratch_shapes=[pltpu.VMEM((bt, Hp), jnp.float32),
                        pltpu.VMEM((bt, Hp), jnp.float32)],
    )

    y, hT, cT = pl.pallas_call(
        kernel,
        out_shape=(jax.ShapeDtypeStruct((Tp, Bp, Hp), x2d.dtype),
                   jax.ShapeDtypeStruct((Bp, Hp), jnp.float32),
                   jax.ShapeDtypeStruct((Bp, Hp), jnp.float32)),
        grid_spec=grid_spec,
        compiler_params=pltpu.CompilerParams(
            dimension_semantics=("parallel", "arbitrary"),
            vmem_limit_bytes=vmem_limit),
    )(gates3, whh, h0, c0)

    if Tp != T:
        y = y[:T]
    return y, hT, cT


# ----------------------------------------------------------------------------- #
# One-time weight fusion + hardware padding (done once, outside the forward pass).
# PyTorch layout: weight_ih (4H, D_in), weight_hh (4H, H), gate order (i, f, g, o).
# We fuse gates along the lane axis, reorder to (i, f, o, g), and zero-pad
# H -> Hp (mult of 128), D_in -> mult of 128, V -> Vp (mult of 128).
# Padded hidden units provably stay exactly zero through the recurrence.
# ----------------------------------------------------------------------------- #
def fuse_params(params, compute_dtype=jnp.bfloat16):
    perm = jnp.array([0, 1, 3, 2])        # (i, f, g, o) -> (i, f, o, g)
    H = params["lstm"][0]["w_hh"].shape[-1]
    Hp = _round_up(H, 128)
    fused = {"lstm": [], "H": H, "Hp": Hp, "compute_dtype": compute_dtype}
    for l, lp in enumerate(params["lstm"]):
        _, d_in = lp["w_ih"].shape
        d_in_p = _round_up(d_in, 128)
        wih = lp["w_ih"].reshape(4, H, d_in)[perm]
        whh = lp["w_hh"].reshape(4, H, H)[perm]
        bb = (lp["b_ih"] + lp["b_hh"]).reshape(4, H)[perm]
        wih = jnp.pad(wih, ((0, 0), (0, Hp - H), (0, d_in_p - d_in)))
        whh = jnp.pad(whh, ((0, 0), (0, Hp - H), (0, Hp - H)))
        bb = jnp.pad(bb, ((0, 0), (0, Hp - H)))
        fused["lstm"].append({
            "w_ih": jnp.transpose(wih, (2, 0, 1)).reshape(d_in_p, 4 * Hp)
                       .astype(compute_dtype),               # (D_in_p, 4Hp)
            "w_hh": jnp.transpose(whh, (2, 0, 1)).reshape(Hp, 4 * Hp)
                       .astype(compute_dtype),               # (Hp, 4Hp)
            "b": bb.reshape(1, 4 * Hp).astype(jnp.float32),   # (1, 4Hp)
        })
        if l == 0:
            fused["Din0"] = d_in
            fused["Din0p"] = d_in_p
    V = params["fc_w"].shape[0]
    Vp = _round_up(V, 128)                                    # lane-dense FC output
    fused["fc_w_t"] = jnp.pad(params["fc_w"].T,
                              ((0, Hp - H), (0, Vp - V))).astype(compute_dtype)
    fused["fc_b"] = jnp.pad(params["fc_b"], (0, Vp - V)).reshape(1, -1) \
                       .astype(jnp.float32)
    fused["V"] = V
    fused["Vp"] = Vp
    return fused


# ----------------------------------------------------------------------------- #
# CharRNN forward: LSTM stack -> dropout (eval: identity) -> flatten -> fc
# ----------------------------------------------------------------------------- #
def char_rnn_forward(fused, x, hidden):
    h0_all, c0_all = hidden                      # each (n_layers, B, H)
    B, T, Din = x.shape
    H, Hp = fused["H"], fused["Hp"]
    V = fused["V"]
    Din0p = fused["Din0p"]
    cdt = fused["compute_dtype"]

    Bp = max(8, _round_up(B, 8))                 # fill f32 sublanes
    vmem_limit = _pick_vmem_limit()
    row_tile = 512 if vmem_limit >= 64 * 1024 * 1024 else 256

    # batch_first -> time-major, pad batch/feature dims, flatten for the big matmul
    xt = jnp.transpose(x, (1, 0, 2))
    xt = jnp.pad(xt, ((0, 0), (0, Bp - B), (0, Din0p - Din)))
    inp2d = xt.astype(cdt).reshape(T * Bp, Din0p)

    h0p = jnp.pad(h0_all.astype(jnp.float32), ((0, 0), (0, Bp - B), (0, Hp - H)))
    c0p = jnp.pad(c0_all.astype(jnp.float32), ((0, 0), (0, Bp - B), (0, Hp - H)))

    h_list, c_list = [], []
    for l, lp in enumerate(fused["lstm"]):
        y3, hT, cT = lstm_layer(inp2d, T, Bp, lp["w_ih"], lp["w_hh"], lp["b"],
                                h0p[l], c0p[l],
                                vmem_limit=vmem_limit, row_tile=row_tile)
        # inter-layer dropout: identity in eval mode
        inp2d = y3.reshape(T * Bp, Hp)
        h_list.append(hT[:B, :H])
        c_list.append(cT[:B, :H])

    # self.dropout(r_output): identity in eval mode.
    # FC runs directly on the time-major (T*Bp, Hp) slab (no pre-FC activation
    # transpose); the tiny (T*Bp, V) logits are reordered to batch_first after.
    logits = matmul_bias(inp2d, fused["fc_w_t"], fused["fc_b"],
                         out_dtype=jnp.float32,
                         vmem_limit=vmem_limit, row_tile=row_tile)
    out = logits[:, :V].reshape(T, Bp, V)[:, :B]
    out = jnp.transpose(out, (1, 0, 2)).reshape(B * T, V)
    hidden_out = (jnp.stack(h_list, axis=0), jnp.stack(c_list, axis=0))
    return out, hidden_out


# ----------------------------------------------------------------------------- #
# Deterministic parameter init (PyTorch-style layout, U(-1/sqrt(H), 1/sqrt(H)))
# ----------------------------------------------------------------------------- #
def init_params(key, n_tokens, n_hidden, n_layers):
    bound = 1.0 / float(jnp.sqrt(jnp.float32(n_hidden)))
    params = {"lstm": []}
    for l in range(n_layers):
        d_in = n_tokens if l == 0 else n_hidden
        key, k1, k2, k3, k4 = jax.random.split(key, 5)
        params["lstm"].append({
            "w_ih": jax.random.uniform(k1, (4 * n_hidden, d_in), jnp.float32,
                                       -bound, bound),
            "w_hh": jax.random.uniform(k2, (4 * n_hidden, n_hidden), jnp.float32,
                                       -bound, bound),
            "b_ih": jax.random.uniform(k3, (4 * n_hidden,), jnp.float32,
                                       -bound, bound),
            "b_hh": jax.random.uniform(k4, (4 * n_hidden,), jnp.float32,
                                       -bound, bound),
        })
    key, k5, k6 = jax.random.split(key, 3)
    params["fc_w"] = jax.random.uniform(k5, (n_tokens, n_hidden), jnp.float32,
                                        -bound, bound)
    params["fc_b"] = jax.random.uniform(k6, (n_tokens,), jnp.float32,
                                        -bound, bound)
    return params


# ----------------------------------------------------------------------------- #
# Pure-JAX reference (f32 math on bf16-rounded operands, PyTorch gate order)
# ----------------------------------------------------------------------------- #
def _reference_forward(params, x, hidden, compute_dtype=jnp.bfloat16):
    def rd(a):
        return a.astype(compute_dtype).astype(jnp.float32)

    h_all, c_all = hidden
    B, T, _ = x.shape
    inp = rd(x)
    h_list, c_list = [], []
    for l, lp in enumerate(params["lstm"]):
        H = lp["w_hh"].shape[-1]
        w_ih, w_hh = rd(lp["w_ih"]), rd(lp["w_hh"])
        b = lp["b_ih"] + lp["b_hh"]
        h, c = h_all[l], c_all[l]
        ys = []
        for t in range(T):
            x_t = inp[:, t, :]
            gates = x_t @ w_ih.T + h @ w_hh.T + b
            i_g = jax.nn.sigmoid(gates[:, :H])
            f_g = jax.nn.sigmoid(gates[:, H:2 * H])
            g_g = jnp.tanh(gates[:, 2 * H:3 * H])
            o_g = jax.nn.sigmoid(gates[:, 3 * H:])
            c = f_g * c + i_g * g_g
            h = o_g * jnp.tanh(c)
            ys.append(h)
        inp = rd(jnp.stack(ys, axis=1))
        h_list.append(h)
        c_list.append(c)
    flat = inp.reshape(-1, inp.shape[-1])
    out = flat @ rd(params["fc_w"]).T + params["fc_b"]
    return out, (jnp.stack(h_list, 0), jnp.stack(c_list, 0))


if __name__ == "__main__":
    n_tokens, n_hidden, n_layers = 16, 32, 2
    B, T = 2, 8

    key = jax.random.PRNGKey(0)
    kp, kx = jax.random.split(key)
    params = init_params(kp, n_tokens, n_hidden, n_layers)
    fused = fuse_params(params)                     # one-time fusion + HW padding

    x = jax.random.normal(kx, (B, T, n_tokens), jnp.float32)
    hidden = (jnp.zeros((n_layers, B, n_hidden), jnp.float32),   # init_hidden()
              jnp.zeros((n_layers, B, n_hidden), jnp.float32))

    out, (h_n, c_n) = char_rnn_forward(fused, x, hidden)
    jax.block_until_ready((out, h_n, c_n))

    assert out.shape == (B * T, n_tokens)
    assert h_n.shape == (n_layers, B, n_hidden)
    assert c_n.shape == (n_layers, B, n_hidden)

    out_ref, (h_ref, c_ref) = _reference_forward(params, x, hidden)
    assert float(jnp.max(jnp.abs(out - out_ref))) < 0.1
    assert float(jnp.max(jnp.abs(h_n - h_ref))) < 0.1
    assert float(jnp.max(jnp.abs(c_n - c_ref))) < 0.1

    print("KERNEL_OK")
</pallas_src>

<mosaic_0001>
module attributes {stable_mosaic.version = 11 : i64} {
  func.func @_k(%arg0: i32, %arg1: memref<8x128xf32, #tpu.memory_space<vmem>>, %arg2: memref<8x128xf32, #tpu.memory_space<vmem>>) attributes {dimension_semantics = [#tpu.dimension_semantics<arbitrary>], iteration_bounds = array<i64: 2>, scalar_prefetch = 0 : i64, scratch_operands = 0 : i64, tpu.core_type = #tpu.core_type<tc>, window_params = [{pipeline_mode = #tpu.pipeline_mode<synchronous>, transform_indices = @transform_0, window_bounds = array<i64: 8, 128>}, {pipeline_mode = #tpu.pipeline_mode<synchronous>, transform_indices = @transform_1, window_bounds = array<i64: 8, 128>}]} {
    %c0 = arith.constant 0 : index
    %c0_0 = arith.constant 0 : index
    %0 = vector.load %arg1[%c0, %c0_0] : memref<8x128xf32, #tpu.memory_space<vmem>>, vector<8x128xf32>
    %cst = arith.constant 1.000000e+00 : f32
    %1 = vector.broadcast %cst : f32 to vector<8x128xf32>
    %2 = arith.addf %0, %1 : vector<8x128xf32>
    %c0_1 = arith.constant 0 : index
    %c0_2 = arith.constant 0 : index
    %3 = vector.load %arg2[%c0_1, %c0_2] : memref<8x128xf32, #tpu.memory_space<vmem>>, vector<8x128xf32>
    tpu.vector_store %arg2[%c0_1, %c0_2], %2 {strides = array<i32>} : memref<8x128xf32, #tpu.memory_space<vmem>>, vector<8x128xf32>,
    return
  }
  func.func @transform_0(%arg0: i32) -> (i32, i32) {
    %c0_i32 = arith.constant 0 : i32
    %c0_i32_0 = arith.constant 0 : i32
    %c0_i32_1 = arith.constant 0 : i32
    return %c0_i32, %c0_i32_0 : i32, i32
  }
  func.func @transform_1(%arg0: i32) -> (i32, i32) {
    %c0_i32 = arith.constant 0 : i32
    %c0_i32_0 = arith.constant 0 : i32
    %c0_i32_1 = arith.constant 0 : i32
    return %c0_i32, %c0_i32_0 : i32, i32
  }
}

module attributes {stable_mosaic.version = 11 : i64} {
  func.func @_matmul_bias_kernel(%arg0: i32, %arg1: i32, %arg2: memref<64x128xbf16, #tpu.memory_space<vmem>>, %arg3: memref<128x512xbf16, #tpu.memory_space<vmem>>, %arg4: memref<1x512xf32, #tpu.memory_space<vmem>>, %arg5: memref<64x512xbf16, #tpu.memory_space<vmem>>) attributes {dimension_semantics = [#tpu.dimension_semantics<parallel>, #tpu.dimension_semantics<parallel>], iteration_bounds = array<i64: 1, 1>, scalar_prefetch = 0 : i64, scratch_operands = 0 : i64, tpu.core_type = #tpu.core_type<tc>, window_params = [{transform_indices = @transform_0, window_bounds = array<i64: 64, 128>}, {transform_indices = @transform_1, window_bounds = array<i64: 128, 512>}, {transform_indices = @transform_2, window_bounds = array<i64: 1, 512>}, {transform_indices = @transform_3, window_bounds = array<i64: 64, 512>}]} {
    %c0 = arith.constant 0 : index
    %c0_0 = arith.constant 0 : index
    %0 = vector.load %arg2[%c0, %c0_0] : memref<64x128xbf16, #tpu.memory_space<vmem>>, vector<64x128xbf16>
    %c0_1 = arith.constant 0 : index
    %c0_2 = arith.constant 0 : index
    %1 = vector.load %arg3[%c0_1, %c0_2] : memref<128x512xbf16, #tpu.memory_space<vmem>>, vector<128x512xbf16>
    %cst = arith.constant dense<0.000000e+00> : vector<64x512xf32>
    %2 = tpu.matmul %0, %1, %cst {dimension_numbers = #tpu.dot_dimension_numbers<[1], [0], [0], [1], [0, 0, 1, 1], [], []>} : vector<64x128xbf16>, vector<128x512xbf16>, vector<64x512xf32> -> vector<64x512xf32>
    %c0_3 = arith.constant 0 : index
    %c0_4 = arith.constant 0 : index
    %3 = vector.load %arg4[%c0_3, %c0_4] : memref<1x512xf32, #tpu.memory_space<vmem>>, vector<1x512xf32>
    %4 = vector.broadcast %3 : vector<1x512xf32> to vector<64x512xf32>
    %5 = arith.addf %2, %4 : vector<64x512xf32>
    %6 = arith.truncf %5 : vector<64x512xf32> to vector<64x512xbf16>
    %c0_5 = arith.constant 0 : index
    %c0_6 = arith.constant 0 : index
    %7 = vector.load %arg5[%c0_5, %c0_6] : memref<64x512xbf16, #tpu.memory_space<vmem>>, vector<64x512xbf16>
    tpu.vector_store %arg5[%c0_5, %c0_6], %6 {strides = array<i32>} : memref<64x512xbf16, #tpu.memory_space<vmem>>, vector<64x512xbf16>,
    return
  }
  func.func @transform_0(%arg0: i32, %arg1: i32) -> (i32, i32) {
    %c0_i32 = arith.constant 0 : i32
    %c0_i32_0 = arith.constant 0 : i32
    return %arg0, %c0_i32 : i32, i32
  }
  func.func @transform_1(%arg0: i32, %arg1: i32) -> (i32, i32) {
    %c0_i32 = arith.constant 0 : i32
    %c0_i32_0 = arith.constant 0 : i32
    return %c0_i32, %arg1 : i32, i32
  }
  func.func @transform_2(%arg0: i32, %arg1: i32) -> (i32, i32) {
    %c0_i32 = arith.constant 0 : i32
    %c0_i32_0 = arith.constant 0 : i32
    return %c0_i32, %arg1 : i32, i32
  }
  func.func @transform_3(%arg0: i32, %arg1: i32) -> (i32, i32) {
    %c0_i32 = arith.constant 0 : i32
    return %arg0, %arg1 : i32, i32
  }
}

</mosaic_0001>

<llo_original>
// kernel: tpu_custom_call.1
$region0: #{tpu_custom_call.1}
  #allocation0 [shape = 'u32[]', space=smem, size = 0x4, offset = 0x4, fixed_abs, tag = 'smem constant byte address 0x4 - core index']
  #allocation1 [shape = 'u32[72,128]{1,0:T(1,128)}', space=vmem, size = 0x9000, scoped, tag = 'internal scratch']
  %s0 = inlined_call_operand.hbm [shape: f32[8,128], index: 0, kind: input, shape index: {}]
  %s1 = inlined_call_operand.hbm [shape: f32[8,128], index: 1, kind: output, shape index: {}]
  %s2 = sld [smem:[#allocation0]]
  $region41: #{tpu_custom_call.1} parent=0
    _
  %s4 = ssub.s32 1, %s2
  %s5 = scalar_select 0, %s4, %s2
  $region1: #{tpu_custom_call.1} parent=0
    #allocation2 [shape = 'u8[4096]{0}', space=vmem, size = 0x1000, scoped, tag = 'input window, operand 0, single buffered']
    #allocation3 [shape = 's32[2]{0}', space=sflag, size = 0x8, scoped, tag = 'scoped memory for tpu_custom_call.1']
    #allocation4 [shape = 's32[2]{0}', space=sflag, size = 0x8, scoped, tag = 'scoped memory for tpu_custom_call.1']
    #allocation5 [shape = 'u8[4096]{0}', space=vmem, size = 0x1000, scoped, tag = 'output window, operand 0, single buffered']
    %6 = vsyncpa [#allocation3], 0
    %7 = vsyncpa [#allocation4], 0
    loop: start=0, step=1, limit=4
    $region2: #{tpu_custom_call.1} parent=1 // loop_pre_header
      _
    $region3: #{tpu_custom_call.1} parent=1 // loop_header
      %s9 = sphi 0, %s13
      %p10 = scmp.ge.s32.totalorder %s9, 4
      %s17 = sphi 0, %s17
      %s19 = sphi 0, %s17
      %s20 = sphi 0, %s19
      %s34 = sphi 0, %s20
      %s38 = sphi 0, %s38
      %s40 = sphi 0, %s38
      %s41 = sphi 0, %s40
      %s55 = sphi 0, %s41
    $region4: #{tpu_custom_call.1} parent=1 // loop_header_branch
      %12 = sbr.rel (%p10) target = $region8
    $region5: #{tpu_custom_call.1} parent=1 // loop_body
      %s14 = ssub.s32 %s9, 1
      %s15 = ssub.s32 %s9, 2
      %s16 = sadd.s32 %s9, 1
      %s18 = sadd.s32 %s17, 1
      %p21 = scmp.eq.s32.totalorder %s9, 1
      %p22 = scmp.ne.s32.totalorder %s17, %s19
      %p23 = scmp.eq.s32.totalorder %s9, 0
      %p24 = por %p22, %p23
      %p25 = scmp.ne.s32.totalorder %s17, %s19
      %p26 = scmp.eq.s32.totalorder %s14, 1
      %p27 = por %p25, %p26
      %p28 = scmp.ne.s32.totalorder %s19, %s20
      %p29 = scmp.eq.s32.totalorder %s14, 0
      %p30 = por %p28, %p29
      %p31 = scmp.ne.s32.totalorder %s19, %s20
      %p32 = scmp.eq.s32.totalorder %s15, 1
      %p33 = por %p31, %p32
      %p35 = scmp.ne.s32.totalorder %s20, %s34
      %p36 = scmp.eq.s32.totalorder %s15, 0
      %p37 = por %p35, %p36
      %s39 = sadd.s32 %s38, 1
      %p42 = scmp.eq.s32.totalorder %s9, 1
      %p43 = scmp.ne.s32.totalorder %s38, %s40
      %p44 = scmp.eq.s32.totalorder %s9, 0
      %p45 = por %p43, %p44
      %p46 = scmp.ne.s32.totalorder %s38, %s40
      %p47 = scmp.eq.s32.totalorder %s14, 1
      %p48 = por %p46, %p47
      %p49 = scmp.ne.s32.totalorder %s40, %s41
      %p50 = scmp.eq.s32.totalorder %s14, 0
      %p51 = por %p49, %p50
      %p52 = scmp.ne.s32.totalorder %s40, %s41
      %p53 = scmp.eq.s32.totalorder %s15, 1
      %p54 = por %p52, %p53
      %p56 = scmp.ne.s32.totalorder %s41, %s55
      %p57 = scmp.eq.s32.totalorder %s15, 0
      %p58 = por %p56, %p57
      %p59 = scmp.le.s32.totalorder 1, %s9
      %p60 = scmp.lt.s32.totalorder %s9, 3
      %p61 = pnand %p59, %p60
      %p62 = pneg %p61
      // Predicated region
      $region9: #{tpu_custom_call.1} parent=5 // pred_check
        _
      $region10: #{tpu_custom_call.1} parent=5 // pred_check_branch
        %64 = sbr.rel (%p61) target = $region12
      $region11: #{tpu_custom_call.1} parent=5 // pred_region
        %s65 = ssub.s32 %s9, 1
        // Predicated region
        $region13: #{tpu_custom_call.1} parent=11 // pred_check
          %p66 = pneg %p30
        $region14: #{tpu_custom_call.1} parent=11 // pred_check_branch
          %68 = sbr.rel (%p66) target = $region16
        $region15: #{tpu_custom_call.1} parent=11 // pred_region
          %70 = vsyncadd [#allocation3], 0
          %s72 = sshll.u32 %s0, 4
          %s73 = int_to_ptr.hbm [resolvable:$true] %s72
          %s74 = sshll.u32 [#allocation2], 4
          %s75 = int_to_ptr.vmem [resolvable:$true] %s74
          %77 = dma.hbm_to_vmem [thread:$0]  %s73, 128, %s75, [#allocation3]
        $region16: #{tpu_custom_call.1} parent=11 // pred_fallthru
          _
      $region12: #{tpu_custom_call.1} parent=5 // pred_fallthru
        _
      %p78 = scmp.lt.s32.totalorder %s9, 2
      // Predicated region
      $region17: #{tpu_custom_call.1} parent=5 // pred_check
        %p79 = pneg %p78
      $region18: #{tpu_custom_call.1} parent=5 // pred_check_branch
        %81 = sbr.rel (%p79) target = $region20
      $region19: #{tpu_custom_call.1} parent=5 // pred_region
        _
      $region20: #{tpu_custom_call.1} parent=5 // pred_fallthru
        _
      %p82 = scmp.le.s32.totalorder 1, %s9
      %p83 = scmp.lt.s32.totalorder %s9, 3
      %p84 = pnand %p82, %p83
      %p85 = pneg %p84
      // Predicated region
      $region21: #{tpu_custom_call.1} parent=5 // pred_check
        _
      $region22: #{tpu_custom_call.1} parent=5 // pred_check_branch
        %87 = sbr.rel (%p84) target = $region24
      $region23: #{tpu_custom_call.1} parent=5 // pred_region
        %s88 = ssub.s32 %s9, 1
        // Predicated region
        $region25: #{tpu_custom_call.1} parent=23 // pred_check
          %p89 = pneg %p30
        $region26: #{tpu_custom_call.1} parent=23 // pred_check_branch
          %91 = sbr.rel (%p89) target = $region28
        $region27: #{tpu_custom_call.1} parent=23 // pred_region
          %93 = dma.done [#allocation3], 128
        $region28: #{tpu_custom_call.1} parent=23 // pred_fallthru
          _
        %p94 = pneg %p30
        %p95 = pneg %p27
        %p96 = pneg %p51
        %p97 = pneg %p48
        %v98 = vld [vmem:[#allocation2] sm:$0xff]
        %v99 = vadd.f32 %v98, 1.0
        %100 = vst [vmem:[#allocation5] sm:$0xff] %v99
        // Predicated region
        $region29: #{tpu_custom_call.1} parent=23 // pred_check
          %p101 = pneg %p48
        $region30: #{tpu_custom_call.1} parent=23 // pred_check_branch
          %103 = sbr.rel (%p101) target = $region32
        $region31: #{tpu_custom_call.1} parent=23 // pred_region
          %105 = vsyncadd [#allocation4], 0
          %s107 = sshll.u32 [#allocation5], 4
          %s108 = int_to_ptr.vmem [resolvable:$true] %s107
          %s109 = sshll.u32 %s1, 4
          %s110 = int_to_ptr.hbm [resolvable:$true] %s109
          %112 = dma.vmem_to_hbm [thread:$0]  %s108, 128, %s110, [#allocation4]
        $region32: #{tpu_custom_call.1} parent=23 // pred_fallthru
          _
        // Predicated region
        $region33: #{tpu_custom_call.1} parent=23 // pred_check
          %p113 = pneg %p48
        $region34: #{tpu_custom_call.1} parent=23 // pred_check_branch
          %115 = sbr.rel (%p113) target = $region36
        $region35: #{tpu_custom_call.1} parent=23 // pred_region
          %117 = dma.done [#allocation4], 128
        $region36: #{tpu_custom_call.1} parent=23 // pred_fallthru
          _
      $region24: #{tpu_custom_call.1} parent=5 // pred_fallthru
        _
      %p118 = scmp.le.s32.totalorder 2, %s9
      // Predicated region
      $region37: #{tpu_custom_call.1} parent=5 // pred_check
        %p119 = pneg %p118
      $region38: #{tpu_custom_call.1} parent=5 // pred_check_branch
        %121 = sbr.rel (%p119) target = $region40
      $region39: #{tpu_custom_call.1} parent=5 // pred_region
        %s122 = ssub.s32 %s9, 2
      $region40: #{tpu_custom_call.1} parent=5 // pred_fallthru
        _
    $region6: #{tpu_custom_call.1} parent=1 // loop_footer
      %s13 = sadd.s32 1, %s9
    $region7: #{tpu_custom_call.1} parent=1 // loop_footer_branch
      %8 = sbr.rel target = $region3
    $region8: #{tpu_custom_call.1} parent=1 // loop_exit
      _
    %123 = vsyncpa [#allocation3], 1
    %s124 = scalar_lea.sflag [#allocation3], 1
    %125 = vsyncpa %s124, 1
    %126 = vsyncpa [#allocation4], 1
    %s127 = scalar_lea.sflag [#allocation4], 1
    %128 = vsyncpa %s127, 1

// kernel: tpu_custom_call.1
$region0: #{tpu_custom_call.1}
  #allocation0 [shape = 'u32[]', space=smem, size = 0x4, offset = 0x4, fixed_abs, tag = 'smem constant byte address 0x4 - core index']
  #allocation1 [shape = 'u32[72,128]{1,0:T(1,128)}', space=vmem, size = 0x9000, scoped, tag = 'internal scratch']
  %s0 = inlined_call_operand.hbm [shape: bf16[64,128], index: 0, kind: input, shape index: {}]
  %s1 = inlined_call_operand.hbm [shape: bf16[128,512], index: 1, kind: input, shape index: {}]
  %s2 = inlined_call_operand.hbm [shape: f32[1,512], index: 2, kind: input, shape index: {}]
  %s3 = inlined_call_operand.hbm [shape: bf16[64,512], index: 3, kind: output, shape index: {}]
  %s4 = sld [smem:[#allocation0]]
  $region34: #{tpu_custom_call.1} parent=0
    _
  %s6 = ssub.s32 1, %s4
  %s7 = scalar_select 0, %s6, %s4
  $region1: #{tpu_custom_call.1} parent=0
    #allocation2 [shape = 'u8[16384]{0}', space=vmem, size = 0x4000, scoped, tag = 'input window, operand 0, single buffered']
    #allocation3 [shape = 's32[1]{0}', space=sflag, size = 0x4, scoped, tag = 'scoped memory for tpu_custom_call.1']
    #allocation4 [shape = 's32[1]{0}', space=sflag, size = 0x4, scoped, tag = 'scoped memory for tpu_custom_call.1']
    #allocation5 [shape = 'u8[131072]{0}', space=vmem, size = 0x20000, scoped, tag = 'input window, operand 1, single buffered']
    #allocation6 [shape = 's32[1]{0}', space=sflag, size = 0x4, scoped, tag = 'scoped memory for tpu_custom_call.1']
    #allocation7 [shape = 'u8[2048]{0}', space=vmem, size = 0x800, scoped, tag = 'input window, operand 2, single buffered']
    #allocation8 [shape = 'u8[65536]{0}', space=vmem, size = 0x10000, scoped, tag = 'output window, operand 0, single buffered']
    %8 = vsyncpa [#allocation3], 0
    %9 = vsyncpa [#allocation6], 0
    %10 = vsyncpa [#allocation4], 0
    // Predicated region
    $region2: #{tpu_custom_call.1} parent=1 // pred_check
      _
    $region3: #{tpu_custom_call.1} parent=1 // pred_check_branch
      %12 = sbr.rel (0) target = $region5
    $region4: #{tpu_custom_call.1} parent=1 // pred_region
      %14 = vsyncadd [#allocation3], 0
      %s15 = sshll.u32 %s0, 4
      %s16 = int_to_ptr.hbm [resolvable:$true] %s15
      %s17 = sshll.u32 [#allocation2], 4
      %s18 = int_to_ptr.vmem [resolvable:$true] %s17
      %23 = dma.hbm_to_vmem [thread:$0]  %s16, 512, %s18, [#allocation3], 64, 64, 4
    $region5: #{tpu_custom_call.1} parent=1 // pred_fallthru
      _
    // Predicated region
    $region6: #{tpu_custom_call.1} parent=1 // pred_check
      _
    $region7: #{tpu_custom_call.1} parent=1 // pred_check_branch
      %25 = sbr.rel (0) target = $region9
    $region8: #{tpu_custom_call.1} parent=1 // pred_region
      %27 = vsyncadd [#allocation6], 0
      %s28 = sshll.u32 %s1, 4
      %s29 = int_to_ptr.hbm [resolvable:$true] %s28
      %s30 = sshll.u32 [#allocation5], 4
      %s31 = int_to_ptr.vmem [resolvable:$true] %s30
      %36 = dma.hbm_to_vmem [thread:$0]  %s29, 4096, %s31, [#allocation6], 256, 256, 16
    $region9: #{tpu_custom_call.1} parent=1 // pred_fallthru
      _
    // Predicated region
    $region10: #{tpu_custom_call.1} parent=1 // pred_check
      _
    $region11: #{tpu_custom_call.1} parent=1 // pred_check_branch
      %38 = sbr.rel (0) target = $region13
    $region12: #{tpu_custom_call.1} parent=1 // pred_region
      %40 = vsyncadd [#allocation6], 0
      %s42 = sshll.u32 %s2, 4
      %s43 = int_to_ptr.hbm [resolvable:$true] %s42
      %s44 = sshll.u32 [#allocation7], 4
      %s45 = int_to_ptr.vmem [resolvable:$true] %s44
      %47 = dma.hbm_to_vmem [thread:$0]  %s43, 64, %s45, [#allocation6]
    $region13: #{tpu_custom_call.1} parent=1 // pred_fallthru
      _
    // Predicated region
    $region14: #{tpu_custom_call.1} parent=1 // pred_check
      _
    $region15: #{tpu_custom_call.1} parent=1 // pred_check_branch
      %49 = sbr.rel (0) target = $region17
    $region16: #{tpu_custom_call.1} parent=1 // pred_region
      %51 = dma.done [#allocation3], 512
    $region17: #{tpu_custom_call.1} parent=1 // pred_fallthru
      _
    // Predicated region
    $region18: #{tpu_custom_call.1} parent=1 // pred_check
      _
    $region19: #{tpu_custom_call.1} parent=1 // pred_check_branch
      %53 = sbr.rel (0) target = $region21
    $region20: #{tpu_custom_call.1} parent=1 // pred_region
      %55 = dma.done [#allocation6], 4096
    $region21: #{tpu_custom_call.1} parent=1 // pred_fallthru
      _
    // Predicated region
    $region22: #{tpu_custom_call.1} parent=1 // pred_check
      _
    $region23: #{tpu_custom_call.1} parent=1 // pred_check_branch
      %57 = sbr.rel (0) target = $region25
    $region24: #{tpu_custom_call.1} parent=1 // pred_region
      %59 = dma.done [#allocation6], 64
    $region25: #{tpu_custom_call.1} parent=1 // pred_fallthru
      _
    %v60 = vld [vmem:[#allocation2] sm:$0xf]
    %v61 = vld [vmem:[#allocation2 + $0x4] sm:$0xf]
    %v62 = vld [vmem:[#allocation2 + $0x8] sm:$0xf]
    %v63 = vld [vmem:[#allocation2 + $0xc] sm:$0xf]
    %v64 = vld [vmem:[#allocation2 + $0x10] sm:$0xf]
    %v65 = vld [vmem:[#allocation2 + $0x14] sm:$0xf]
    %v66 = vld [vmem:[#allocation2 + $0x18] sm:$0xf]
    %v67 = vld [vmem:[#allocation2 + $0x1c] sm:$0xf]
    %v68 = vld [vmem:[#allocation5] sm:$0xff]
    %v69 = vld [vmem:[#allocation5 + $0x8] sm:$0xff]
    %v70 = vld [vmem:[#allocation5 + $0x10] sm:$0xff]
    %v71 = vld [vmem:[#allocation5 + $0x18] sm:$0xff]
    %v72 = vld [vmem:[#allocation5 + $0x20] sm:$0xff]
    %v73 = vld [vmem:[#allocation5 + $0x28] sm:$0xff]
    %v74 = vld [vmem:[#allocation5 + $0x30] sm:$0xff]
    %v75 = vld [vmem:[#allocation5 + $0x38] sm:$0xff]
    %v76 = vld [vmem:[#allocation5 + $0x40] sm:$0xff]
    %v77 = vld [vmem:[#allocation5 + $0x48] sm:$0xff]
    %v78 = vld [vmem:[#allocation5 + $0x50] sm:$0xff]
    %v79 = vld [vmem:[#allocation5 + $0x58] sm:$0xff]
    %v80 = vld [vmem:[#allocation5 + $0x60] sm:$0xff]
    %v81 = vld [vmem:[#allocation5 + $0x68] sm:$0xff]
    %v82 = vld [vmem:[#allocation5 + $0x70] sm:$0xff]
    %v83 = vld [vmem:[#allocation5 + $0x78] sm:$0xff]
    %v84 = vld [vmem:[#allocation5 + $0x80] sm:$0xff]
    %v85 = vld [vmem:[#allocation5 + $0x88] sm:$0xff]
    %v86 = vld [vmem:[#allocation5 + $0x90] sm:$0xff]
    %v87 = vld [vmem:[#allocation5 + $0x98] sm:$0xff]
    %v88 = vld [vmem:[#allocation5 + $0xa0] sm:$0xff]
    %v89 = vld [vmem:[#allocation5 + $0xa8] sm:$0xff]
    %v90 = vld [vmem:[#allocation5 + $0xb0] sm:$0xff]
    %v91 = vld [vmem:[#allocation5 + $0xb8] sm:$0xff]
    %v92 = vld [vmem:[#allocation5 + $0xc0] sm:$0xff]
    %v93 = vld [vmem:[#allocation5 + $0xc8] sm:$0xff]
    %v94 = vld [vmem:[#allocation5 + $0xd0] sm:$0xff]
    %v95 = vld [vmem:[#allocation5 + $0xd8] sm:$0xff]
    %v96 = vld [vmem:[#allocation5 + $0xe0] sm:$0xff]
    %v97 = vld [vmem:[#allocation5 + $0xe8] sm:$0xff]
    %v98 = vld [vmem:[#allocation5 + $0xf0] sm:$0xff]
    %v99 = vld [vmem:[#allocation5 + $0xf8] sm:$0xff]
    %v100 = vld [vmem:[#allocation7] sm:$0xf]
    %v102 = vperm.slane %v100, 0
    %v103 = vperm.slane %v100, 1
    %v104 = vperm.slane %v100, 2
    %v105 = vperm.slane %v100, 3
    %v118 = vunpack.c.l.b16 %v60
    %v119 = vunpack.c.l.b16 %v61
    %v120 = vunpack.c.l.b16 %v62
    %v121 = vunpack.c.l.b16 %v63
    %v122 = vunpack.c.l.b16 %v64
    %v123 = vunpack.c.l.b16 %v65
    %v124 = vunpack.c.l.b16 %v66
    %v125 = vunpack.c.l.b16 %v67
    %v126 = vpack.c.b16 %v119, %v118
    %v127 = vpack.c.b16 %v121, %v120
    %v128 = vpack.c.b16 %v123, %v122
    %v129 = vpack.c.b16 %v125, %v124
    %v166 = vunpack.c.l.b16 %v68
    %v167 = vunpack.c.h.b16 %v68
    %v168 = vunpack.c.l.b16 %v69
    %v169 = vunpack.c.h.b16 %v69
    %v170 = vunpack.c.l.b16 %v70
    %v171 = vunpack.c.h.b16 %v70
    %v172 = vunpack.c.l.b16 %v71
    %v173 = vunpack.c.h.b16 %v71
    %v174 = vunpack.c.l.b16 %v72
    %v175 = vunpack.c.h.b16 %v72
    %v176 = vunpack.c.l.b16 %v73
    %v177 = vunpack.c.h.b16 %v73
    %v178 = vunpack.c.l.b16 %v74
    %v179 = vunpack.c.h.b16 %v74
    %v180 = vunpack.c.l.b16 %v75
    %v181 = vunpack.c.h.b16 %v75
    %v182 = vunpack.c.l.b16 %v76
    %v183 = vunpack.c.h.b16 %v76
    %v184 = vunpack.c.l.b16 %v77
    %v185 = vunpack.c.h.b16 %v77
    %v186 = vunpack.c.l.b16 %v78
    %v187 = vunpack.c.h.b16 %v78
    %v188 = vunpack.c.l.b16 %v79
    %v189 = vunpack.c.h.b16 %v79
    %v190 = vunpack.c.l.b16 %v80
    %v191 = vunpack.c.h.b16 %v80
    %v192 = vunpack.c.l.b16 %v81
    %v193 = vunpack.c.h.b16 %v81
    %v194 = vunpack.c.l.b16 %v82
    %v195 = vunpack.c.h.b16 %v82
    %v196 = vunpack.c.l.b16 %v83
    %v197 = vunpack.c.h.b16 %v83
    %v198 = vunpack.c.l.b16 %v84
    %v199 = vunpack.c.h.b16 %v84
    %v200 = vunpack.c.l.b16 %v85
    %v201 = vunpack.c.h.b16 %v85
    %v202 = vunpack.c.l.b16 %v86
    %v203 = vunpack.c.h.b16 %v86
    %v204 = vunpack.c.l.b16 %v87
    %v205 = vunpack.c.h.b16 %v87
    %v206 = vunpack.c.l.b16 %v88
    %v207 = vunpack.c.h.b16 %v88
    %v208 = vunpack.c.l.b16 %v89
    %v209 = vunpack.c.h.b16 %v89
    %v210 = vunpack.c.l.b16 %v90
    %v211 = vunpack.c.h.b16 %v90
    %v212 = vunpack.c.l.b16 %v91
    %v213 = vunpack.c.h.b16 %v91
    %v214 = vunpack.c.l.b16 %v92
    %v215 = vunpack.c.h.b16 %v92
    %v216 = vunpack.c.l.b16 %v93
    %v217 = vunpack.c.h.b16 %v93
    %v218 = vunpack.c.l.b16 %v94
    %v219 = vunpack.c.h.b16 %v94
    %v220 = vunpack.c.l.b16 %v95
    %v221 = vunpack.c.h.b16 %v95
    %v222 = vunpack.c.l.b16 %v96
    %v223 = vunpack.c.h.b16 %v96
    %v224 = vunpack.c.l.b16 %v97
    %v225 = vunpack.c.h.b16 %v97
    %v226 = vunpack.c.l.b16 %v98
    %v227 = vunpack.c.h.b16 %v98
    %v228 = vunpack.c.l.b16 %v99
    %v229 = vunpack.c.h.b16 %v99
    %v230 = vpack.c.b16 %v170, %v166
    %v231 = vpack.c.b16 %v171, %v167
    %v232 = vpack.c.b16 %v172, %v168
    %v233 = vpack.c.b16 %v173, %v169
    %v234 = vpack.c.b16 %v178, %v174
    %v235 = vpack.c.b16 %v179, %v175
    %v236 = vpack.c.b16 %v180, %v176
    %v237 = vpack.c.b16 %v181, %v177
    %v238 = vpack.c.b16 %v186, %v182
    %v239 = vpack.c.b16 %v187, %v183
    %v240 = vpack.c.b16 %v188, %v184
    %v241 = vpack.c.b16 %v189, %v185
    %v242 = vpack.c.b16 %v194, %v190
    %v243 = vpack.c.b16 %v195, %v191
    %v244 = vpack.c.b16 %v196, %v192
    %v245 = vpack.c.b16 %v197, %v193
    %v246 = vpack.c.b16 %v202, %v198
    %v247 = vpack.c.b16 %v203, %v199
    %v248 = vpack.c.b16 %v204, %v200
    %v249 = vpack.c.b16 %v205, %v201
    %v250 = vpack.c.b16 %v210, %v206
    %v251 = vpack.c.b16 %v211, %v207
    %v252 = vpack.c.b16 %v212, %v208
    %v253 = vpack.c.b16 %v213, %v209
    %v254 = vpack.c.b16 %v218, %v214
    %v255 = vpack.c.b16 %v219, %v215
    %v256 = vpack.c.b16 %v220, %v216
    %v257 = vpack.c.b16 %v221, %v217
    %v258 = vpack.c.b16 %v226, %v222
    %v259 = vpack.c.b16 %v227, %v223
    %v260 = vpack.c.b16 %v228, %v224
    %v261 = vpack.c.b16 %v229, %v225
    %294 = vmatpush.bf16.msra.mxu0 %v258
    %295 = vmatpush.bf16.msra.mxu0 %v254
    %296 = vmatpush.bf16.msra.mxu0 %v250
    %297 = vmatpush.bf16.msra.mxu0 %v246
    %298 = vmatpush.bf16.msra.mxu0 %v242
    %299 = vmatpush.bf16.msra.mxu0 %v238
    %300 = vmatpush.bf16.msra.mxu0 %v234
    %301 = vmatpush.bf16.msra.mxu0 %v230
    %302 = vmatmul.bf16.gmra.mxu0 %v126
    %v303 = vpop.f32.mrf.mxu0
    %v304 = vadd.f32 %v102, %v303
    %v305 = vpop.f32.mrf.mxu0
    %v306 = vadd.f32 %v102, %v305
    %307 = vmatmul.bf16.gmra.mxu0 %v127
    %v308 = vpop.f32.mrf.mxu0
    %v309 = vadd.f32 %v102, %v308
    %v310 = vpop.f32.mrf.mxu0
    %v311 = vadd.f32 %v102, %v310
    %312 = vmatmul.bf16.gmra.mxu0 %v128
    %v313 = vpop.f32.mrf.mxu0
    %v314 = vadd.f32 %v102, %v313
    %v315 = vpop.f32.mrf.mxu0
    %v316 = vadd.f32 %v102, %v315
    %317 = vmatmul.bf16.gmra.mxu0 %v129
    %v318 = vpop.f32.mrf.mxu0
    %v319 = vadd.f32 %v102, %v318
    %v320 = vpop.f32.mrf.mxu0
    %v321 = vadd.f32 %v102, %v320
    %322 = vdwg.mxu0
    %323 = vmatpush.bf16.msra.mxu0 %v259
    %324 = vmatpush.bf16.msra.mxu0 %v255
    %325 = vmatpush.bf16.msra.mxu0 %v251
    %326 = vmatpush.bf16.msra.mxu0 %v247
    %327 = vmatpush.bf16.msra.mxu0 %v243
    %328 = vmatpush.bf16.msra.mxu0 %v239
    %329 = vmatpush.bf16.msra.mxu0 %v235
    %330 = vmatpush.bf16.msra.mxu0 %v231
    %331 = vmatmul.bf16.gmra.mxu0 %v126
    %v332 = vpop.f32.mrf.mxu0
    %v333 = vadd.f32 %v103, %v332
    %v334 = vpop.f32.mrf.mxu0
    %v335 = vadd.f32 %v103, %v334
    %336 = vmatmul.bf16.gmra.mxu0 %v127
    %v337 = vpop.f32.mrf.mxu0
    %v338 = vadd.f32 %v103, %v337
    %v339 = vpop.f32.mrf.mxu0
    %v340 = vadd.f32 %v103, %v339
    %341 = vmatmul.bf16.gmra.mxu0 %v128
    %v342 = vpop.f32.mrf.mxu0
    %v343 = vadd.f32 %v103, %v342
    %v344 = vpop.f32.mrf.mxu0
    %v345 = vadd.f32 %v103, %v344
    %346 = vmatmul.bf16.gmra.mxu0 %v129
    %v347 = vpop.f32.mrf.mxu0
    %v348 = vadd.f32 %v103, %v347
    %v349 = vpop.f32.mrf.mxu0
    %v350 = vadd.f32 %v103, %v349
    %351 = vdwg.mxu0
    %352 = vmatpush.bf16.msra.mxu0 %v260
    %353 = vmatpush.bf16.msra.mxu0 %v256
    %354 = vmatpush.bf16.msra.mxu0 %v252
    %355 = vmatpush.bf16.msra.mxu0 %v248
    %356 = vmatpush.bf16.msra.mxu0 %v244
    %357 = vmatpush.bf16.msra.mxu0 %v240
    %358 = vmatpush.bf16.msra.mxu0 %v236
    %359 = vmatpush.bf16.msra.mxu0 %v232
    %360 = vmatmul.bf16.gmra.mxu0 %v126
    %v361 = vpop.f32.mrf.mxu0
    %v362 = vadd.f32 %v104, %v361
    %v363 = vpop.f32.mrf.mxu0
    %v364 = vadd.f32 %v104, %v363
    %365 = vmatmul.bf16.gmra.mxu0 %v127
    %v366 = vpop.f32.mrf.mxu0
    %v367 = vadd.f32 %v104, %v366
    %v368 = vpop.f32.mrf.mxu0
    %v369 = vadd.f32 %v104, %v368
    %370 = vmatmul.bf16.gmra.mxu0 %v128
    %v371 = vpop.f32.mrf.mxu0
    %v372 = vadd.f32 %v104, %v371
    %v373 = vpop.f32.mrf.mxu0
    %v374 = vadd.f32 %v104, %v373
    %375 = vmatmul.bf16.gmra.mxu0 %v129
    %v376 = vpop.f32.mrf.mxu0
    %v377 = vadd.f32 %v104, %v376
    %v378 = vpop.f32.mrf.mxu0
    %v379 = vadd.f32 %v104, %v378
    %380 = vdwg.mxu0
    %381 = vmatpush.bf16.msra.mxu0 %v261
    %382 = vmatpush.bf16.msra.mxu0 %v257
    %383 = vmatpush.bf16.msra.mxu0 %v253
    %384 = vmatpush.bf16.msra.mxu0 %v249
    %385 = vmatpush.bf16.msra.mxu0 %v245
    %386 = vmatpush.bf16.msra.mxu0 %v241
    %387 = vmatpush.bf16.msra.mxu0 %v237
    %388 = vmatpush.bf16.msra.mxu0 %v233
    %389 = vmatmul.bf16.gmra.mxu0 %v126
    %v390 = vpop.f32.mrf.mxu0
    %v391 = vadd.f32 %v105, %v390
    %v392 = vpop.f32.mrf.mxu0
    %v393 = vadd.f32 %v105, %v392
    %394 = vmatmul.bf16.gmra.mxu0 %v127
    %v395 = vpop.f32.mrf.mxu0
    %v396 = vadd.f32 %v105, %v395
    %v397 = vpop.f32.mrf.mxu0
    %v398 = vadd.f32 %v105, %v397
    %399 = vmatmul.bf16.gmra.mxu0 %v128
    %v400 = vpop.f32.mrf.mxu0
    %v401 = vadd.f32 %v105, %v400
    %v402 = vpop.f32.mrf.mxu0
    %v403 = vadd.f32 %v105, %v402
    %404 = vmatmul.bf16.gmra.mxu0 %v129
    %v405 = vpop.f32.mrf.mxu0
    %v406 = vadd.f32 %v105, %v405
    %v407 = vpop.f32.mrf.mxu0
    %v408 = vadd.f32 %v105, %v407
    %409 = vdwg.mxu0
    %v410 = vpack.c.bf16 %v333, %v304
    %v411 = vpack.c.bf16 %v391, %v362
    %v412 = vpack.c.bf16 %v335, %v306
    %v413 = vpack.c.bf16 %v393, %v364
    %v414 = vpack.c.bf16 %v338, %v309
    %v415 = vpack.c.bf16 %v396, %v367
    %v416 = vpack.c.bf16 %v340, %v311
    %v417 = vpack.c.bf16 %v398, %v369
    %v418 = vpack.c.bf16 %v343, %v314
    %v419 = vpack.c.bf16 %v401, %v372
    %v420 = vpack.c.bf16 %v345, %v316
    %v421 = vpack.c.bf16 %v403, %v374
    %v422 = vpack.c.bf16 %v348, %v319
    %v423 = vpack.c.bf16 %v406, %v377
    %v424 = vpack.c.bf16 %v350, %v321
    %v425 = vpack.c.bf16 %v408, %v379
    %426 = vst [vmem:[#allocation8] sm:$0xff] %v410
    %427 = vst [vmem:[#allocation8 + $0x8] sm:$0xff] %v411
    %428 = vst [vmem:[#allocation8 + $0x10] sm:$0xff] %v412
    %429 = vst [vmem:[#allocation8 + $0x18] sm:$0xff] %v413
    %430 = vst [vmem:[#allocation8 + $0x20] sm:$0xff] %v414
    %431 = vst [vmem:[#allocation8 + $0x28] sm:$0xff] %v415
    %432 = vst [vmem:[#allocation8 + $0x30] sm:$0xff] %v416
    %433 = vst [vmem:[#allocation8 + $0x38] sm:$0xff] %v417
    %434 = vst [vmem:[#allocation8 + $0x40] sm:$0xff] %v418
    %435 = vst [vmem:[#allocation8 + $0x48] sm:$0xff] %v419
    %436 = vst [vmem:[#allocation8 + $0x50] sm:$0xff] %v420
    %437 = vst [vmem:[#allocation8 + $0x58] sm:$0xff] %v421
    %438 = vst [vmem:[#allocation8 + $0x60] sm:$0xff] %v422
    %439 = vst [vmem:[#allocation8 + $0x68] sm:$0xff] %v423
    %440 = vst [vmem:[#allocation8 + $0x70] sm:$0xff] %v424
    %441 = vst [vmem:[#allocation8 + $0x78] sm:$0xff] %v425
    // Predicated region
    $region26: #{tpu_custom_call.1} parent=1 // pred_check
      _
    $region27: #{tpu_custom_call.1} parent=1 // pred_check_branch
      %443 = sbr.rel (0) target = $region29
    $region28: #{tpu_custom_call.1} parent=1 // pred_region
      %445 = vsyncadd [#allocation4], 0
      %s446 = sshll.u32 [#allocation8], 4
      %s447 = int_to_ptr.vmem [resolvable:$true] %s446
      %s448 = sshll.u32 %s3, 4
      %s449 = int_to_ptr.hbm [resolvable:$true] %s448
      %454 = dma.vmem_to_hbm [thread:$0]  %s447, 2048, %s449, [#allocation4], 256, 256, 16
    $region29: #{tpu_custom_call.1} parent=1 // pred_fallthru
      _
    // Predicated region
    $region30: #{tpu_custom_call.1} parent=1 // pred_check
      _
    $region31: #{tpu_custom_call.1} parent=1 // pred_check_branch
      %456 = sbr.rel (0) target = $region33
    $region32: #{tpu_custom_call.1} parent=1 // pred_region
      %458 = dma.done [#allocation4], 2048
    $region33: #{tpu_custom_call.1} parent=1 // pred_fallthru
      _
    %459 = vsyncpa [#allocation3], 1
    %460 = vsyncpa [#allocation6], 1
    %461 = vsyncpa [#allocation4], 1

</llo_original>
